<compile_context>
chip_gen: v7x
topology: tpu7x:2x2x1
jax: 0.10.0
libtpu: 0.0.40
codegen_flags: <defaults>
</compile_context>

<pallas_src>
import functools

import jax
import jax.numpy as jnp
from jax import lax
from jax.experimental import pallas as pl
from jax.experimental.pallas import tpu as pltpu

SUBLANES = 8
LANE_WIDTH_CANDIDATES = (1024, 512, 256, 128)
PAD_FALLBACK_WIDTH = 512
# Per-buffer byte budget in f32-equivalent terms (block_rows * width * 4 bytes).
SUM_BLOCK_BUDGET = 4 << 20    # 2 input streams x 2 buffers -> <= 16 MiB + tiny acc
ELEM_BLOCK_BUDGET = 2 << 20   # 3 streams x 2 buffers -> <= 12 MiB (v5e friendly)


def _round_up(a, b):
    return ((a + b - 1) // b) * b


def _sublane_multiple(*dtypes):
    """Row alignment: 8 for 4-byte dtypes, 16 for 2-byte, 32 for 1-byte."""
    m = SUBLANES
    for dt in dtypes:
        itemsize = jnp.dtype(dt).itemsize
        m = max(m, SUBLANES * max(1, 4 // itemsize))
    return m


def _pow_gamma(diff, gamma):
    """|t - p| ** gamma with gamma a compile-time constant (diff >= 0)."""
    g = float(gamma)
    if g == 1.5:                                   # the QFocalLoss default
        return diff * jnp.sqrt(diff)
    if g.is_integer():
        k = int(g)
        return jnp.ones_like(diff) if k == 0 else lax.integer_pow(diff, k)
    if (2.0 * g).is_integer():                     # other half-integer gammas
        k = int(2.0 * g)
        root = jnp.sqrt(diff)
        return root if k // 2 == 0 else lax.integer_pow(diff, k // 2) * root
    # general fallback: safe pow (0**gamma = 0 without log(0) NaN/Inf)
    return jnp.where(diff > 0.0,
                     jnp.exp(g * jnp.log(jnp.maximum(diff, 1e-38))), 0.0)


def _focal_terms(x, t, alpha, gamma):
    """Elementwise quality-focal loss terms (float32)."""
    e = jnp.exp(-jnp.abs(x))                                 # shared exp(-|x|)
    bce = jnp.maximum(x, 0.0) - x * t + jnp.log1p(e)         # stable BCE-with-logits
    inv = pl.reciprocal(1.0 + e, approx=True)                # EUP vrcp (approx)
    p = jnp.where(x >= 0.0, inv, e * inv)                    # stable sigmoid, same exp
    alpha_factor = t * alpha + (1.0 - t) * (1.0 - alpha)
    modulating = _pow_gamma(jnp.abs(t - p), gamma)
    return bce * alpha_factor * modulating


def _qfocal_sum_kernel(pred_ref, true_ref, out_ref, acc_ref, *,
                       alpha, gamma, block_rows, width, inner_tiles,
                       num_tiles, tail_valid, has_overhang):
    c = pl.program_id(0)        # "parallel" axis (2-TC split on v7x)
    t = pl.program_id(1)        # "arbitrary" reduction axis
    tile_idx = c * inner_tiles + t
    groups = block_rows // SUBLANES

    @pl.when(t == 0)
    def _():
        acc_ref[...] = jnp.zeros_like(acc_ref)

    def accumulate(mask_tail):
        x = pred_ref[...].astype(jnp.float32)
        tt = true_ref[...].astype(jnp.float32)
        loss = _focal_terms(x, tt, alpha, gamma)
        if mask_tail:
            # tail_valid is a compile-time Python int < block_rows*width, so the
            # tile-local compare never overflows int32 however large the input is.
            row = lax.broadcasted_iota(jnp.int32, (block_rows, width), 0)
            col = lax.broadcasted_iota(jnp.int32, (block_rows, width), 1)
            loss = jnp.where(row * width + col < tail_valid, loss, 0.0)
        # Fold the tile into the (8, width) sublane-group accumulator: vreg-aligned
        # 8-row slices and pure VPU adds (no XLU), tiny acc load/store per step.
        part = loss[0:SUBLANES, :]
        for g in range(1, groups):
            part = part + loss[g * SUBLANES:(g + 1) * SUBLANES, :]
        acc_ref[...] += part

    masked = tail_valid < block_rows * width      # static: padding in the last tile
    last = num_tiles - 1
    if masked:
        @pl.when(tile_idx == last)
        def _():
            accumulate(True)
        if num_tiles > 1:
            @pl.when(tile_idx < last)
            def _():
                accumulate(False)
    elif has_overhang:
        @pl.when(tile_idx <= last)                # skip the clamped overhang step
        def _():
            accumulate(False)
    else:
        accumulate(False)

    @pl.when(t == pl.num_programs(1) - 1)
    def _():
        # Reduce lanes down to a single (8,128) vreg with 128-lane-aligned slices
        # (VPU adds only); the scalar sum of this lane-dense block happens in XLA.
        red = acc_ref[:, 0:128]
        for j in range(1, width // 128):
            red = red + acc_ref[:, j * 128:(j + 1) * 128]
        out_ref[...] = red


def _qfocal_elem_kernel(pred_ref, true_ref, out_ref, *, alpha, gamma):
    x = pred_ref[...].astype(jnp.float32)
    t = true_ref[...].astype(jnp.float32)
    out_ref[...] = _focal_terms(x, t, alpha, gamma).astype(out_ref.dtype)


def _plan(n, sub, block_budget_bytes):
    """Pick (width, rows, block_rows, needs_pad) for a lane-dense 2D slab.

    Prefers an exact fit (no pad copies, no tail mask): sweeps lane widths AND
    block_rows divisors before falling back to padding.
    """
    best = None
    for w in LANE_WIDTH_CANDIDATES:
        if n % w:
            continue
        rows = n // w
        if rows % sub:
            continue
        max_rows = max(sub, (block_budget_bytes // (w * 4)) // sub * sub)
        br = 0
        r = sub
        limit = min(rows, max_rows)
        while r <= limit:
            if rows % r == 0:
                br = r
            r += sub
        if br == 0:
            continue
        score = br * w                      # prefer the biggest exact-fit tile
        if best is None or score > best[0]:
            best = (score, w, rows, br)
    if best is not None:
        _, w, rows, br = best
        return w, rows, br, False
    # Fallback: pad up to whole tiles (costs HBM copies; last tile masked in-kernel).
    w = PAD_FALLBACK_WIDTH
    max_rows = max(sub, (block_budget_bytes // (w * 4)) // sub * sub)
    rows_needed = -(-n // w)
    br = min(max_rows, _round_up(rows_needed, sub))
    rows = _round_up(rows_needed, br)
    return w, rows, br, True


def _to_slab(a, w, rows, needs_pad):
    flat = a.reshape(-1)                    # native dtype: no f32 upcast copy in HBM
    if needs_pad:
        flat = jnp.pad(flat, (0, rows * w - flat.shape[0]))
    return flat.reshape(rows, w)


def qfocal_loss(pred, true, gamma=1.5, alpha=0.25, reduction="mean"):
    """Quality Focal Loss over BCEWithLogits. pred/true: same shape (any layout)."""
    assert pred.shape == true.shape
    orig_shape = pred.shape
    n = pred.size
    sub = _sublane_multiple(pred.dtype, true.dtype)
    is_reduce = reduction in ("mean", "sum")
    budget = SUM_BLOCK_BUDGET if is_reduce else ELEM_BLOCK_BUDGET
    w, rows, block_rows, needs_pad = _plan(n, sub, budget)
    p_slab = _to_slab(pred, w, rows, needs_pad)
    t_slab = _to_slab(true, w, rows, needs_pad)
    num_tiles = rows // block_rows
    in_bytes = block_rows * w * (p_slab.dtype.itemsize + t_slab.dtype.itemsize)

    if is_reduce:
        # Split the reduction across (up to) 2 cores; works for odd tile counts by
        # clamping the overhang step's index_map and skipping it in-kernel.
        nc = 2 if num_tiles >= 2 else 1
        inner = -(-num_tiles // nc)
        has_overhang = nc * inner > num_tiles
        tail_valid = n - (num_tiles - 1) * block_rows * w
        last = num_tiles - 1

        def in_map(c, t):
            idx = c * inner + t
            if has_overhang:
                idx = jnp.minimum(idx, last)          # redundant (skipped) fetch only
            return (idx, 0)

        vmem_limit = min(2 * in_bytes + SUBLANES * w * 4
                         + 2 * SUBLANES * 128 * 4 + (8 << 20), 64 << 20)
        partials = pl.pallas_call(
            functools.partial(
                _qfocal_sum_kernel, alpha=float(alpha), gamma=float(gamma),
                block_rows=block_rows, width=w, inner_tiles=inner,
                num_tiles=num_tiles, tail_valid=tail_valid,
                has_overhang=has_overhang),
            out_shape=jax.ShapeDtypeStruct((nc * SUBLANES, 128), jnp.float32),
            grid_spec=pltpu.PrefetchScalarGridSpec(
                num_scalar_prefetch=0,
                grid=(nc, inner),
                in_specs=[
                    pl.BlockSpec((block_rows, w), in_map),
                    pl.BlockSpec((block_rows, w), in_map),
                ],
                out_specs=pl.BlockSpec((SUBLANES, 128), lambda c, t: (c, 0)),
                scratch_shapes=[pltpu.VMEM((SUBLANES, w), jnp.float32)],
            ),
            compiler_params=pltpu.CompilerParams(
                dimension_semantics=("parallel", "arbitrary"),
                vmem_limit_bytes=vmem_limit),
        )(p_slab, t_slab)
        total = jnp.sum(partials)
        if reduction == "mean":
            return total / jnp.float32(n)
        return total

    # reduction == 'none'
    out_dtype = jnp.result_type(pred.dtype, true.dtype)
    if not jnp.issubdtype(out_dtype, jnp.floating):
        out_dtype = jnp.float32
    out_itemsize = jnp.dtype(out_dtype).itemsize
    vmem_limit = min(2 * in_bytes + 2 * block_rows * w * out_itemsize + (8 << 20),
                     64 << 20)
    out = pl.pallas_call(
        functools.partial(_qfocal_elem_kernel, alpha=float(alpha), gamma=float(gamma)),
        out_shape=jax.ShapeDtypeStruct((rows, w), out_dtype),
        grid_spec=pltpu.PrefetchScalarGridSpec(
            num_scalar_prefetch=0,
            grid=(num_tiles,),
            in_specs=[
                pl.BlockSpec((block_rows, w), lambda i: (i, 0)),
                pl.BlockSpec((block_rows, w), lambda i: (i, 0)),
            ],
            out_specs=pl.BlockSpec((block_rows, w), lambda i: (i, 0)),
        ),
        compiler_params=pltpu.CompilerParams(
            dimension_semantics=("parallel",),
            vmem_limit_bytes=vmem_limit),
    )(p_slab, t_slab)
    if needs_pad:
        return out.reshape(-1)[:n].reshape(orig_shape)
    return out.reshape(orig_shape)


def _qfocal_ref(pred, true, gamma=1.5, alpha=0.25, reduction="mean"):
    """Pure-JAX reference mirroring the PyTorch module."""
    x = pred.astype(jnp.float32)
    t = true.astype(jnp.float32)
    bce = jnp.maximum(x, 0.0) - x * t + jnp.log1p(jnp.exp(-jnp.abs(x)))
    p = jax.nn.sigmoid(x)
    loss = bce * (t * alpha + (1 - t) * (1 - alpha)) * jnp.abs(t - p) ** gamma
    if reduction == "mean":
        return loss.mean()
    if reduction == "sum":
        return loss.sum()
    return loss


if __name__ == "__main__":
    key = jax.random.PRNGKey(0)
    k1, k2 = jax.random.split(key)
    # Small NCHW-like logits and soft (quality) targets, as in YOLO's objectness head.
    pred = jax.random.normal(k1, (2, 4, 16, 16), dtype=jnp.float32) * 2.0
    true = jax.random.uniform(k2, (2, 4, 16, 16), dtype=jnp.float32)

    # Default: BCEWithLogitsLoss(reduction='mean') wrapped by QFocalLoss(gamma=1.5, alpha=0.25)
    out_mean = jax.block_until_ready(qfocal_loss(pred, true, reduction="mean"))
    out_sum = jax.block_until_ready(qfocal_loss(pred, true, reduction="sum"))
    out_none = jax.block_until_ready(qfocal_loss(pred, true, reduction="none"))

    ref_mean = _qfocal_ref(pred, true, reduction="mean")
    ref_sum = _qfocal_ref(pred, true, reduction="sum")
    ref_none = _qfocal_ref(pred, true, reduction="none")
    # Tolerances account for the EUP approximate reciprocal in the in-kernel sigmoid.
    assert jnp.allclose(out_mean, ref_mean, atol=2e-3, rtol=2e-2)
    assert jnp.allclose(out_sum, ref_sum, atol=2e-3, rtol=2e-2)
    assert jnp.allclose(out_none, ref_none, atol=2e-3, rtol=2e-2)

    print("KERNEL_OK")
</pallas_src>

<mosaic_0001>
module attributes {stable_mosaic.version = 11 : i64} {
  func.func @_qfocal_sum_kernel(%arg0: i32, %arg1: i32, %arg2: memref<8x256xf32, #tpu.memory_space<vmem>>, %arg3: memref<8x256xf32, #tpu.memory_space<vmem>>, %arg4: memref<8x128xf32, #tpu.memory_space<vmem>>, %arg5: memref<8x256xf32, #tpu.memory_space<vmem>>) attributes {dimension_semantics = [#tpu.dimension_semantics<parallel>, #tpu.dimension_semantics<arbitrary>], iteration_bounds = array<i64: 1, 1>, scalar_prefetch = 0 : i64, scratch_operands = 1 : i64, tpu.core_type = #tpu.core_type<tc>, window_params = [{transform_indices = @transform_0, window_bounds = array<i64: 8, 256>}, {transform_indices = @transform_1, window_bounds = array<i64: 8, 256>}, {transform_indices = @transform_2, window_bounds = array<i64: 8, 128>}]} {
    %c0_i32 = arith.constant 0 : i32
    %0 = arith.cmpi eq, %arg1, %c0_i32 : i32
    %1 = arith.extui %0 : i1 to i32
    %c0_i32_0 = arith.constant 0 : i32
    %2 = arith.cmpi ne, %1, %c0_i32_0 : i32
    scf.if %2 {
      %cst_16 = arith.constant 0.000000e+00 : f32
      %41 = vector.broadcast %cst_16 : f32 to vector<8x256xf32>
      %c0_17 = arith.constant 0 : index
      %c0_18 = arith.constant 0 : index
      %42 = vector.load %arg5[%c0_17, %c0_18] : memref<8x256xf32, #tpu.memory_space<vmem>>, vector<8x256xf32>
      tpu.vector_store %arg5[%c0_17, %c0_18], %41 {strides = array<i32>} : memref<8x256xf32, #tpu.memory_space<vmem>>, vector<8x256xf32>,
    } else {
    }
    %c0 = arith.constant 0 : index
    %c0_1 = arith.constant 0 : index
    %3 = vector.load %arg2[%c0, %c0_1] : memref<8x256xf32, #tpu.memory_space<vmem>>, vector<8x256xf32>
    %c0_2 = arith.constant 0 : index
    %c0_3 = arith.constant 0 : index
    %4 = vector.load %arg3[%c0_2, %c0_3] : memref<8x256xf32, #tpu.memory_space<vmem>>, vector<8x256xf32>
    %5 = math.absf %3 : vector<8x256xf32>
    %cst = arith.constant 0.000000e+00 : f32
    %6 = vector.broadcast %cst : f32 to vector<8x256xf32>
    %7 = arith.subf %6, %5 : vector<8x256xf32>
    %8 = math.exp %7 : vector<8x256xf32>
    %cst_4 = arith.constant 0.000000e+00 : f32
    %9 = vector.broadcast %cst_4 : f32 to vector<8x256xf32>
    %10 = arith.maximumf %3, %9 : vector<8x256xf32>
    %11 = arith.mulf %3, %4 : vector<8x256xf32>
    %12 = arith.subf %10, %11 : vector<8x256xf32>
    %13 = math.log1p %8 : vector<8x256xf32>
    %14 = arith.addf %12, %13 : vector<8x256xf32>
    %cst_5 = arith.constant 1.000000e+00 : f32
    %15 = vector.broadcast %cst_5 : f32 to vector<8x256xf32>
    %16 = arith.addf %15, %8 : vector<8x256xf32>
    %17 = tpu.reciprocal %16 {approx = true} : vector<8x256xf32> -> vector<8x256xf32>
    %cst_6 = arith.constant 0.000000e+00 : f32
    %18 = vector.broadcast %cst_6 : f32 to vector<8x256xf32>
    %19 = arith.cmpf oge, %3, %18 : vector<8x256xf32>
    %20 = arith.mulf %8, %17 : vector<8x256xf32>
    %21 = arith.select %19, %17, %20 : vector<8x256xi1>, vector<8x256xf32>
    %cst_7 = arith.constant 2.500000e-01 : f32
    %22 = vector.broadcast %cst_7 : f32 to vector<8x256xf32>
    %23 = arith.mulf %4, %22 : vector<8x256xf32>
    %cst_8 = arith.constant 1.000000e+00 : f32
    %24 = vector.broadcast %cst_8 : f32 to vector<8x256xf32>
    %25 = arith.subf %24, %4 : vector<8x256xf32>
    %cst_9 = arith.constant 7.500000e-01 : f32
    %26 = vector.broadcast %cst_9 : f32 to vector<8x256xf32>
    %27 = arith.mulf %25, %26 : vector<8x256xf32>
    %28 = arith.addf %23, %27 : vector<8x256xf32>
    %29 = arith.subf %4, %21 : vector<8x256xf32>
    %30 = math.absf %29 : vector<8x256xf32>
    %31 = math.sqrt %30 : vector<8x256xf32>
    %32 = arith.mulf %30, %31 : vector<8x256xf32>
    %33 = arith.mulf %14, %28 : vector<8x256xf32>
    %34 = arith.mulf %33, %32 : vector<8x256xf32>
    %c0_10 = arith.constant 0 : index
    %c0_11 = arith.constant 0 : index
    %35 = vector.load %arg5[%c0_10, %c0_11] : memref<8x256xf32, #tpu.memory_space<vmem>>, vector<8x256xf32>
    %36 = arith.addf %35, %34 : vector<8x256xf32>
    %c0_12 = arith.constant 0 : index
    %c0_13 = arith.constant 0 : index
    %37 = vector.load %arg5[%c0_12, %c0_13] : memref<8x256xf32, #tpu.memory_space<vmem>>, vector<8x256xf32>
    tpu.vector_store %arg5[%c0_12, %c0_13], %36 {strides = array<i32>} : memref<8x256xf32, #tpu.memory_space<vmem>>, vector<8x256xf32>,
    %c0_i32_14 = arith.constant 0 : i32
    %38 = arith.cmpi eq, %arg1, %c0_i32_14 : i32
    %39 = arith.extui %38 : i1 to i32
    %c0_i32_15 = arith.constant 0 : i32
    %40 = arith.cmpi ne, %39, %c0_i32_15 : i32
    scf.if %40 {
      %c0_16 = arith.constant 0 : index
      %c0_17 = arith.constant 0 : index
      %41 = vector.load %arg5[%c0_16, %c0_17] : memref<8x256xf32, #tpu.memory_space<vmem>>, vector<8x128xf32>
      %c0_18 = arith.constant 0 : index
      %c128 = arith.constant 128 : index
      %42 = vector.load %arg5[%c0_18, %c128] : memref<8x256xf32, #tpu.memory_space<vmem>>, vector<8x128xf32>
      %43 = arith.addf %41, %42 : vector<8x128xf32>
      %c0_19 = arith.constant 0 : index
      %c0_20 = arith.constant 0 : index
      %44 = vector.load %arg4[%c0_19, %c0_20] : memref<8x128xf32, #tpu.memory_space<vmem>>, vector<8x128xf32>
      tpu.vector_store %arg4[%c0_19, %c0_20], %43 {strides = array<i32>} : memref<8x128xf32, #tpu.memory_space<vmem>>, vector<8x128xf32>,
    } else {
    }
    return
  }
  func.func @transform_0(%arg0: i32, %arg1: i32) -> (i32, i32) {
    %c1_i32 = arith.constant 1 : i32
    %0 = arith.muli %arg0, %c1_i32 : i32
    %1 = arith.addi %0, %arg1 : i32
    %c0_i32 = arith.constant 0 : i32
    %c0_i32_0 = arith.constant 0 : i32
    return %1, %c0_i32 : i32, i32
  }
  func.func @transform_1(%arg0: i32, %arg1: i32) -> (i32, i32) {
    %c1_i32 = arith.constant 1 : i32
    %0 = arith.muli %arg0, %c1_i32 : i32
    %1 = arith.addi %0, %arg1 : i32
    %c0_i32 = arith.constant 0 : i32
    %c0_i32_0 = arith.constant 0 : i32
    return %1, %c0_i32 : i32, i32
  }
  func.func @transform_2(%arg0: i32, %arg1: i32) -> (i32, i32) {
    %c0_i32 = arith.constant 0 : i32
    %c0_i32_0 = arith.constant 0 : i32
    return %arg0, %c0_i32 : i32, i32
  }
}

</mosaic_0001>

<llo_original>
// kernel: tpu_custom_call.1
$region0: #{tpu_custom_call.1}
  #allocation0 [shape = 'u32[]', space=smem, size = 0x4, offset = 0x4, fixed_abs, tag = 'smem constant byte address 0x4 - core index']
  #allocation1 [shape = 'u32[144,128]{1,0:T(1,128)}', space=vmem, size = 0x12000, scoped, tag = 'internal scratch']
  #allocation2 [shape = 'f32[8,256]{1,0:T(8,128)}', space=vmem, size = 0x2000, scoped, tag = 'scratch operand']
  %s0 = inlined_call_operand.hbm [shape: f32[8,256], index: 0, kind: input, shape index: {}]
  %s1 = inlined_call_operand.hbm [shape: f32[8,256], index: 1, kind: input, shape index: {}]
  %s2 = inlined_call_operand.hbm [shape: f32[8,128], index: 2, kind: output, shape index: {}]
  %s3 = sld [smem:[#allocation0]]
  $region34: #{tpu_custom_call.1} parent=0
    _
  %s5 = ssub.s32 1, %s3
  %s6 = scalar_select 0, %s5, %s3
  $region1: #{tpu_custom_call.1} parent=0
    #allocation3 [shape = 'u8[8192]{0}', space=vmem, size = 0x2000, scoped, tag = 'input window, operand 0, single buffered']
    #allocation4 [shape = 's32[1]{0}', space=sflag, size = 0x4, scoped, tag = 'scoped memory for tpu_custom_call.1']
    #allocation5 [shape = 's32[1]{0}', space=sflag, size = 0x4, scoped, tag = 'scoped memory for tpu_custom_call.1']
    #allocation6 [shape = 'u8[8192]{0}', space=vmem, size = 0x2000, scoped, tag = 'input window, operand 1, single buffered']
    #allocation7 [shape = 's32[1]{0}', space=sflag, size = 0x4, scoped, tag = 'scoped memory for tpu_custom_call.1']
    #allocation8 [shape = 'u8[4096]{0}', space=vmem, size = 0x1000, scoped, tag = 'output window, operand 0, single buffered']
    %7 = vsyncpa [#allocation4], 0
    %8 = vsyncpa [#allocation7], 0
    %9 = vsyncpa [#allocation5], 0
    // Predicated region
    $region2: #{tpu_custom_call.1} parent=1 // pred_check
      _
    $region3: #{tpu_custom_call.1} parent=1 // pred_check_branch
      %11 = sbr.rel (0) target = $region5
    $region4: #{tpu_custom_call.1} parent=1 // pred_region
      %s12 = sadd.s32 0, 0
      %s14 = ssub.s32 256, 256
      %15 = vsyncadd [#allocation4], %s14
      %s16 = smul.addr %s12, 2
      %s17 = smul.addr %s16, 128
      %s18 = scalar_lea.hbm %s0, %s17
      %s20 = sshll.u32 [#allocation3], 4
      %s21 = int_to_ptr.vmem [resolvable:$true] %s20
      %23 = dma.hbm_to_vmem [thread:$0]  %s18, 256, %s21, [#allocation4]
    $region5: #{tpu_custom_call.1} parent=1 // pred_fallthru
      _
    // Predicated region
    $region6: #{tpu_custom_call.1} parent=1 // pred_check
      _
    $region7: #{tpu_custom_call.1} parent=1 // pred_check_branch
      %25 = sbr.rel (0) target = $region9
    $region8: #{tpu_custom_call.1} parent=1 // pred_region
      %s26 = sadd.s32 0, 0
      %s28 = ssub.s32 256, 256
      %29 = vsyncadd [#allocation7], %s28
      %s30 = smul.addr %s26, 2
      %s31 = smul.addr %s30, 128
      %s32 = scalar_lea.hbm %s1, %s31
      %s34 = sshll.u32 [#allocation6], 4
      %s35 = int_to_ptr.vmem [resolvable:$true] %s34
      %37 = dma.hbm_to_vmem [thread:$0]  %s32, 256, %s35, [#allocation7]
    $region9: #{tpu_custom_call.1} parent=1 // pred_fallthru
      _
    // Predicated region
    $region10: #{tpu_custom_call.1} parent=1 // pred_check
      _
    $region11: #{tpu_custom_call.1} parent=1 // pred_check_branch
      %39 = sbr.rel (0) target = $region13
    $region12: #{tpu_custom_call.1} parent=1 // pred_region
      %40 = dma.done [#allocation4], 256
    $region13: #{tpu_custom_call.1} parent=1 // pred_fallthru
      _
    // Predicated region
    $region14: #{tpu_custom_call.1} parent=1 // pred_check
      _
    $region15: #{tpu_custom_call.1} parent=1 // pred_check_branch
      %42 = sbr.rel (0) target = $region17
    $region16: #{tpu_custom_call.1} parent=1 // pred_region
      %43 = dma.done [#allocation7], 256
    $region17: #{tpu_custom_call.1} parent=1 // pred_fallthru
      _
    %s44 = sadd.s32 0, 0
    %s45 = sadd.s32 0, 0
    %p46 = scmp.eq.s32.totalorder 0, 0
    // Predicated region
    $region18: #{tpu_custom_call.1} parent=1 // pred_check
      %p47 = pneg %p46
    $region19: #{tpu_custom_call.1} parent=1 // pred_check_branch
      %49 = sbr.rel (%p47) target = $region21
    $region20: #{tpu_custom_call.1} parent=1 // pred_region
      %50 = vst [vmem:[#allocation2] sm:$0xff] 0.0
      %51 = vst [vmem:[#allocation2 + $0x8] sm:$0xff] 0.0
    $region21: #{tpu_custom_call.1} parent=1 // pred_fallthru
      _
    %v52 = vld [vmem:[#allocation3] sm:$0xff]
    %v53 = vld [vmem:[#allocation3 + $0x8] sm:$0xff]
    %v54 = vld [vmem:[#allocation6] sm:$0xff]
    %v55 = vld [vmem:[#allocation6 + $0x8] sm:$0xff]
    %v56 = vand.u32 2147483647, %v52
    %v57 = vand.u32 2147483647, %v53
    %v58 = vsub.f32 0.0, %v56
    %v59 = vsub.f32 0.0, %v57
    %v60 = vmul.f32 %v58, 1.442695
    %v61 = vpow.pop %v60
    %v62 = vmul.f32 %v59, 1.442695
    %v63 = vpow.pop %v62
    %v64 = vmax.f32 %v52, 0.0
    %v65 = vmax.f32 %v53, 0.0
    %v66 = vmul.f32 %v52, %v54
    %v67 = vmul.f32 %v53, %v55
    %v68 = vsub.f32 %v64, %v66
    %v69 = vsub.f32 %v65, %v67
    %v70 = vadd.f32 %v61, 1.0
    %v71 = vlog2.pop %v70
    %v72 = vmul.f32 %v71, 0.6931472
    %v73 = vmul.f32 -0.5, %v61
    %v74 = vadd.f32 %v73, 1.0
    %v75 = vmul.f32 %v74, %v61
    %v76 = vand.u32 2147483647, %v61
    %vm77 = vcmp.lt.f32.partialorder %v76, 0.0004427343
    %v78 = vsel %vm77, %v75, %v72
    %v79 = vadd.f32 %v63, 1.0
    %v80 = vlog2.pop %v79
    %v81 = vmul.f32 %v80, 0.6931472
    %v82 = vmul.f32 -0.5, %v63
    %v83 = vadd.f32 %v82, 1.0
    %v84 = vmul.f32 %v83, %v63
    %v85 = vand.u32 2147483647, %v63
    %vm86 = vcmp.lt.f32.partialorder %v85, 0.0004427343
    %v87 = vsel %vm86, %v84, %v81
    %v88 = vadd.f32 %v68, %v78
    %v89 = vadd.f32 %v69, %v87
    %v90 = vadd.f32 %v61, 1.0
    %v91 = vadd.f32 %v63, 1.0
    %v92 = vrcp.pop %v90
    %v93 = vrcp.pop %v91
    %vm94 = vcmp.ge.f32.partialorder %v52, 0.0
    %vm95 = vcmp.ge.f32.partialorder %v53, 0.0
    %v96 = vmul.f32 %v61, %v92
    %v97 = vmul.f32 %v63, %v93
    %v98 = vsel %vm94, %v92, %v96
    %v99 = vsel %vm95, %v93, %v97
    %v100 = vmul.f32 %v54, 0.25
    %v101 = vmul.f32 %v55, 0.25
    %v102 = vsub.f32 1.0, %v54
    %v103 = vsub.f32 1.0, %v55
    %v104 = vmul.f32 %v102, 0.75
    %v105 = vmul.f32 %v103, 0.75
    %v106 = vadd.f32 %v100, %v104
    %v107 = vadd.f32 %v101, %v105
    %v108 = vsub.f32 %v54, %v98
    %v109 = vsub.f32 %v55, %v99
    %v110 = vand.u32 2147483647, %v108
    %v111 = vand.u32 2147483647, %v109
    %v112 = vrsqrt.pop %v110
    %v113 = vmul.f32 %v110, %v112
    %vm114 = vcmp.eq.f32.partialorder %v110, inf
    %v115 = vsel %vm114, %v110, %v113
    %vm116 = vcmp.eq.f32.partialorder %v110, 0.0
    %v117 = vand.u32 %v110, 2147483648
    %v118 = vsel %vm116, %v117, %v115
    %v119 = vrsqrt.pop %v111
    %v120 = vmul.f32 %v111, %v119
    %vm121 = vcmp.eq.f32.partialorder %v111, inf
    %v122 = vsel %vm121, %v111, %v120
    %vm123 = vcmp.eq.f32.partialorder %v111, 0.0
    %v124 = vand.u32 %v111, 2147483648
    %v125 = vsel %vm123, %v124, %v122
    %v126 = vmul.f32 %v110, %v118
    %v127 = vmul.f32 %v111, %v125
    %v128 = vmul.f32 %v88, %v106
    %v129 = vmul.f32 %v89, %v107
    %v130 = vmul.f32 %v128, %v126
    %v131 = vmul.f32 %v129, %v127
    %v132 = vld [vmem:[#allocation2] sm:$0xff]
    %v133 = vld [vmem:[#allocation2 + $0x8] sm:$0xff]
    %v134 = vadd.f32 %v132, %v130
    %v135 = vadd.f32 %v133, %v131
    %136 = vst [vmem:[#allocation2] sm:$0xff] %v134
    %137 = vst [vmem:[#allocation2 + $0x8] sm:$0xff] %v135
    // Predicated region
    $region22: #{tpu_custom_call.1} parent=1 // pred_check
      %p138 = pneg %p46
    $region23: #{tpu_custom_call.1} parent=1 // pred_check_branch
      %140 = sbr.rel (%p138) target = $region25
    $region24: #{tpu_custom_call.1} parent=1 // pred_region
      %v141 = vld [vmem:[#allocation2] sm:$0xff]
      %v142 = vld [vmem:[#allocation2 + $0x8] sm:$0xff]
      %v143 = vadd.f32 %v141, %v142
      %144 = vst [vmem:[#allocation8] sm:$0xff] %v143
    $region25: #{tpu_custom_call.1} parent=1 // pred_fallthru
      _
    // Predicated region
    $region26: #{tpu_custom_call.1} parent=1 // pred_check
      _
    $region27: #{tpu_custom_call.1} parent=1 // pred_check_branch
      %146 = sbr.rel (0) target = $region29
    $region28: #{tpu_custom_call.1} parent=1 // pred_region
      %s148 = ssub.s32 128, 128
      %149 = vsyncadd [#allocation5], %s148
      %s151 = sshll.u32 [#allocation8], 4
      %s152 = int_to_ptr.vmem [resolvable:$true] %s151
      %154 = dma.vmem_to_hbm [thread:$0]  %s152, 128, %s2, [#allocation5]
    $region29: #{tpu_custom_call.1} parent=1 // pred_fallthru
      _
    // Predicated region
    $region30: #{tpu_custom_call.1} parent=1 // pred_check
      _
    $region31: #{tpu_custom_call.1} parent=1 // pred_check_branch
      %156 = sbr.rel (0) target = $region33
    $region32: #{tpu_custom_call.1} parent=1 // pred_region
      %157 = dma.done [#allocation5], 128
    $region33: #{tpu_custom_call.1} parent=1 // pred_fallthru
      _
    %158 = vsyncpa [#allocation4], 1
    %159 = vsyncpa [#allocation7], 1
    %160 = vsyncpa [#allocation5], 1

</llo_original>
